<compile_context>
chip_gen: v7x
topology: tpu7x:2x2x1
jax: 0.10.0
libtpu: 0.0.40
codegen_flags: <defaults>
</compile_context>

<pallas_src>
import jax
import jax.numpy as jnp
from jax.experimental import pallas as pl
from jax.experimental.pallas import tpu as pltpu

# Single full-array VMEM block only up to this many bytes; above it, use the
# two-pass gridded path (safe on v7x's smaller 64 MiB VMEM as well).
_SINGLE_BLOCK_LIMIT_BYTES = 2 * 1024 * 1024
_TILE_ROWS = 512  # (512, 128) f32 tile = 256 KiB per input block


# ---------------------------------------------------------------------------
# Small path: one full-array VMEM block, fused reduce + select + add.
# ---------------------------------------------------------------------------
def _cond_add_sub_kernel(x_ref, o_ref):
    x = x_ref[...]
    total = jnp.sum(x, dtype=jnp.float32)
    offset = jnp.where(total > 0, jnp.float32(1.0), jnp.float32(-1.0))
    o_ref[...] = (x.astype(jnp.float32) + offset).astype(o_ref.dtype)


def _run_single_block(slab):
    return pl.pallas_call(
        _cond_add_sub_kernel,
        out_shape=jax.ShapeDtypeStruct(slab.shape, slab.dtype),
        in_specs=[pl.BlockSpec(memory_space=pltpu.MemorySpace.VMEM)],
        out_specs=pl.BlockSpec(memory_space=pltpu.MemorySpace.VMEM),
    )(slab)


# ---------------------------------------------------------------------------
# Large path: pass 1 = tiled sum (accumulator across "arbitrary" grid axis).
# ---------------------------------------------------------------------------
def _sum_tile_kernel(x_ref, s_ref):
    @pl.when(pl.program_id(0) == 0)
    def _():
        s_ref[...] = jnp.zeros_like(s_ref)

    s_ref[...] = s_ref[...] + jnp.sum(x_ref[...], dtype=jnp.float32)


def _run_tiled_sum(slab):
    rows, cols = slab.shape
    grid = (rows // _TILE_ROWS,)
    total = pl.pallas_call(
        _sum_tile_kernel,
        out_shape=jax.ShapeDtypeStruct((1, 1), jnp.float32),
        grid_spec=pltpu.PrefetchScalarGridSpec(
            num_scalar_prefetch=0,
            grid=grid,
            in_specs=[pl.BlockSpec((_TILE_ROWS, cols), lambda i: (i, 0))],
            out_specs=pl.BlockSpec((1, 1), lambda i: (0, 0)),
        ),
        compiler_params=pltpu.CompilerParams(
            dimension_semantics=("arbitrary",)),
    )(slab)
    return total[0, 0]


# ---------------------------------------------------------------------------
# Large path: pass 2 = tiled elementwise add of the selected offset.
# ---------------------------------------------------------------------------
def _add_tile_kernel(off_ref, x_ref, o_ref):
    off = off_ref[0, 0]
    o_ref[...] = (x_ref[...].astype(jnp.float32) + off).astype(o_ref.dtype)


def _run_tiled_add(slab, offset_2d):
    rows, cols = slab.shape
    grid = (rows // _TILE_ROWS,)
    return pl.pallas_call(
        _add_tile_kernel,
        out_shape=jax.ShapeDtypeStruct(slab.shape, slab.dtype),
        grid_spec=pltpu.PrefetchScalarGridSpec(
            num_scalar_prefetch=0,
            grid=grid,
            in_specs=[
                pl.BlockSpec(memory_space=pltpu.MemorySpace.SMEM),
                pl.BlockSpec((_TILE_ROWS, cols), lambda i: (i, 0)),
            ],
            out_specs=pl.BlockSpec((_TILE_ROWS, cols), lambda i: (i, 0)),
        ),
        compiler_params=pltpu.CompilerParams(
            dimension_semantics=("parallel",)),
    )(offset_2d, slab)


# ---------------------------------------------------------------------------
# Wrapper
# ---------------------------------------------------------------------------
def _pad_to_lane_slab(x_flat, row_multiple=1):
    """Zero-pad a flat array to a lane-dense (rows, 128) slab.

    Zero padding leaves the global sum unchanged, so no in-kernel masking is
    needed; padded rows are sliced away afterwards.
    """
    n = x_flat.shape[0]
    cols = 128
    rows = -(-n // cols)
    rows = -(-rows // row_multiple) * row_multiple
    padded = rows * cols
    if padded != n:
        x_flat = jnp.pad(x_flat, (0, padded - n))
    return x_flat.reshape(rows, cols)


@jax.jit
def wrapper_forward(x):
    """Pallas equivalent of Wrapper().forward(x). Returns a new array."""
    orig_shape = x.shape
    n = x.size
    nbytes = n * x.dtype.itemsize

    if nbytes <= _SINGLE_BLOCK_LIMIT_BYTES:
        slab = _pad_to_lane_slab(x.reshape(-1))
        out_slab = _run_single_block(slab)
    else:
        slab = _pad_to_lane_slab(x.reshape(-1), row_multiple=_TILE_ROWS)
        total = _run_tiled_sum(slab)
        offset = jnp.where(total > 0, jnp.float32(1.0),
                           jnp.float32(-1.0)).reshape(1, 1)
        out_slab = _run_tiled_add(slab, offset)

    return out_slab.reshape(-1)[:n].reshape(orig_shape)


if __name__ == "__main__":
    key = jax.random.PRNGKey(0)

    # Small NCHW input consistent with the module: (batch=2, C=4, H=16, W=16).
    x = jax.random.normal(key, (2, 4, 16, 16), dtype=jnp.float32)
    out = jax.block_until_ready(wrapper_forward(x))

    ref = jnp.where(jnp.sum(x) > 0, x + 1.0, x - 1.0)
    assert out.shape == x.shape and out.dtype == x.dtype
    assert jnp.allclose(out, ref), "small-path mismatch vs reference"

    # Also exercise the tiled two-pass path (> 2 MiB) once for coverage.
    key2 = jax.random.PRNGKey(1)
    x_big = jax.random.normal(key2, (8, 4, 256, 256), dtype=jnp.float32)
    out_big = jax.block_until_ready(wrapper_forward(x_big))
    ref_big = jnp.where(jnp.sum(x_big) > 0, x_big + 1.0, x_big - 1.0)
    assert out_big.shape == x_big.shape and out_big.dtype == x_big.dtype
    assert jnp.allclose(out_big, ref_big), "tiled-path mismatch vs reference"

    print("KERNEL_OK")
</pallas_src>

<mosaic_0001>
module attributes {stable_mosaic.version = 11 : i64} {
  func.func @_cond_add_sub_kernel(%arg0: memref<16x128xf32, #tpu.memory_space<vmem>>, %arg1: memref<16x128xf32, #tpu.memory_space<vmem>>) attributes {dimension_semantics = [], scalar_prefetch = 0 : i64, scratch_operands = 0 : i64, tpu.core_type = #tpu.core_type<tc>} {
    %c0 = arith.constant 0 : index
    %c0_0 = arith.constant 0 : index
    %0 = vector.load %arg0[%c0, %c0_0] : memref<16x128xf32, #tpu.memory_space<vmem>>, vector<16x128xf32>
    %1 = vector.shape_cast %0 : vector<16x128xf32> to vector<1x16x128xf32>
    %cst = arith.constant dense<0.000000e+00> : vector<1xf32>
    %2 = vector.multi_reduction <add>, %1, %cst [1, 2] : vector<1x16x128xf32> to vector<1xf32>
    %3 = vector.shape_cast %2 : vector<1xf32> to vector<1x1x1xf32>
    %4 = vector.extract %3[0, 0, 0] : f32 from vector<1x1x1xf32>
    %cst_1 = arith.constant 0.000000e+00 : f32
    %5 = arith.cmpf ogt, %4, %cst_1 : f32
    %cst_2 = arith.constant 1.000000e+00 : f32
    %cst_3 = arith.constant -1.000000e+00 : f32
    %6 = arith.select %5, %cst_2, %cst_3 : f32
    %7 = vector.broadcast %6 : f32 to vector<16x128xf32>
    %8 = arith.addf %0, %7 : vector<16x128xf32>
    %c0_4 = arith.constant 0 : index
    %c0_5 = arith.constant 0 : index
    %9 = vector.load %arg1[%c0_4, %c0_5] : memref<16x128xf32, #tpu.memory_space<vmem>>, vector<16x128xf32>
    tpu.vector_store %arg1[%c0_4, %c0_5], %8 {strides = array<i32>} : memref<16x128xf32, #tpu.memory_space<vmem>>, vector<16x128xf32>,
    return
  }
}

</mosaic_0001>

<llo_original>
// kernel: wrapper_forward.1
$region0: #{wrapper_forward.1}
  #allocation0 [shape = 'u32[]', space=smem, size = 0x4, offset = 0x4, fixed_abs, tag = 'smem constant byte address 0x4 - core index']
  #allocation1 [shape = 'u32[144,128]{1,0:T(1,128)}', space=vmem, size = 0x12000, scoped, tag = 'internal scratch']
  %s0 = inlined_call_operand.vmem [shape: f32[16,128], index: 0, kind: input, shape index: {}]
  %s1 = inlined_call_operand.vmem [shape: f32[16,128], index: 1, kind: output, shape index: {}]
  %s2 = sld [smem:[#allocation0]]
  $region14: #{wrapper_forward.1} parent=0
    _
  %s4 = ssub.s32 1, %s2
  %s5 = scalar_select 0, %s4, %s2
  // Predicated region
  $region2: #{wrapper_forward.1} parent=0 // pred_check
    _
  $region3: #{wrapper_forward.1} parent=0 // pred_check_branch
    %7 = sbr.rel (0) target = $region5
  $region4: #{wrapper_forward.1} parent=0 // pred_region
    _
  $region5: #{wrapper_forward.1} parent=0 // pred_fallthru
    _
  %v8 = vld [vmem:[%s0] sm:$0xff]
  %v9 = vld [vmem:[%s0 + $0x8] sm:$0xff]
  %v10 = vadd.f32 %v8, %v9
  %11 = vadd.xlane.f32.xlu0 %v10
  %v12 = vpop.xlane.xlu0 %11
  %v13 = vrot.slane %v12, 4
  %v14 = vadd.f32 %v12, %v13
  %v15 = vrot.slane %v14, 2
  %v16 = vadd.f32 %v14, %v15
  %v17 = vrot.slane %v16, 1
  %v18 = vadd.f32 %v16, %v17
  %s19 = vtos %v18
  %p20 = scmp.gt.f32.partialorder %s19, 0.0
  %s21 = scalar_select %p20, 1.0, -1.0
  %v22 = vstv %s21
  %v23 = vadd.f32 %v8, %v22
  %v24 = vadd.f32 %v9, %v22
  %25 = vst [vmem:[%s1] sm:$0xff] %v23
  %26 = vst [vmem:[%s1 + $0x8] sm:$0xff] %v24
  // Predicated region
  $region6: #{wrapper_forward.1} parent=0 // pred_check
    _
  $region7: #{wrapper_forward.1} parent=0 // pred_check_branch
    %28 = sbr.rel (0) target = $region9
  $region8: #{wrapper_forward.1} parent=0 // pred_region
    _
  $region9: #{wrapper_forward.1} parent=0 // pred_fallthru
    _
  // Predicated region
  $region10: #{wrapper_forward.1} parent=0 // pred_check
    _
  $region11: #{wrapper_forward.1} parent=0 // pred_check_branch
    %30 = sbr.rel (0) target = $region13
  $region12: #{wrapper_forward.1} parent=0 // pred_region
    _
  $region13: #{wrapper_forward.1} parent=0 // pred_fallthru
    _

</llo_original>
